<compile_context>
chip_gen: v7x
topology: tpu7x:2x2x1
jax: 0.10.0
libtpu: 0.0.40
codegen_flags: <defaults>
</compile_context>

<pallas_src>
import functools

import jax
import jax.numpy as jnp
from jax import lax
from jax.experimental import pallas as pl
from jax.experimental.pallas import tpu as pltpu

N_HIDDEN = 100  # fixed by the PyTorch module


def _round_up(n, m):
    return ((n + m - 1) // m) * m


# ----------------------------------------------------------------------------
# Shared spread + fused-fc3 body (operates on one [rows, Hp] tile of h).
# ----------------------------------------------------------------------------
def _spread_fc3_compute(h, x_min, x_max, w3, b3, *, spread_factor,
                        approx_reciprocal, compute_dtype):
    denom = x_max - x_min
    safe = jnp.where(denom == 0.0, jnp.ones_like(denom), denom)
    # Hoisted reciprocal on a single [1, Hp] row; *spread_factor folded in.
    scale = pl.reciprocal(safe, approx=approx_reciprocal) * float(spread_factor)
    x_prime = (h - x_min) * scale                      # [rows, Hp] in [0, sf]

    blocks = []
    for s in range(spread_factor):
        c = float(s) + 0.5
        blk = jnp.maximum(0.0, 1.0 - jnp.abs(c - x_prime))
        if s == 0:                       # first centroid: saturate below
            blk = jnp.where(x_prime < c, 1.0, blk)
        if s == spread_factor - 1:       # last centroid: saturate above
            blk = jnp.where(x_prime > c, 1.0, blk)
        blocks.append(blk)
    # Each block is exactly Hp (=128k) lanes wide -> concat is vreg placement.
    spread = blocks[0] if spread_factor == 1 else jnp.concatenate(blocks, axis=-1)

    # Single fused MXU matmul, K = SF*Hp; bias added once at the end.
    out = jnp.dot(spread.astype(compute_dtype), w3.astype(compute_dtype),
                  preferred_element_type=jnp.float32)
    return out + b3


# ----------------------------------------------------------------------------
# Single-block kernel (whole padded batch resident in VMEM, one launch).
# ----------------------------------------------------------------------------
def _spreadv2_fused_kernel(x_ref, w1_ref, b1_ref, w3_ref, b3_ref, o_ref, *,
                           spread_factor, valid_b, approx_reciprocal,
                           compute_dtype):
    h = jnp.dot(x_ref[...].astype(compute_dtype),
                w1_ref[...].astype(compute_dtype),
                preferred_element_type=jnp.float32) + b1_ref[...]

    if valid_b < x_ref.shape[0]:
        # Zero-padded batch rows: mask them out of the min/max only.
        row = lax.broadcasted_iota(jnp.int32, h.shape, 0)
        valid = row < valid_b
        x_max = jnp.max(jnp.where(valid, h, -jnp.inf), axis=0, keepdims=True)
        x_min = jnp.min(jnp.where(valid, h, jnp.inf), axis=0, keepdims=True)
    else:
        x_max = jnp.max(h, axis=0, keepdims=True)
        x_min = jnp.min(h, axis=0, keepdims=True)

    o_ref[...] = _spread_fc3_compute(
        h, x_min, x_max, w3_ref[...], b3_ref[...],
        spread_factor=spread_factor, approx_reciprocal=approx_reciprocal,
        compute_dtype=compute_dtype)


# ----------------------------------------------------------------------------
# Tiled path, pass 1: batch-global per-neuron min/max over B tiles.
# ----------------------------------------------------------------------------
def _minmax_pass_kernel(x_ref, w1_ref, b1_ref, min_ref, max_ref, *,
                        valid_b, tile_b, compute_dtype):
    i = pl.program_id(0)
    h = jnp.dot(x_ref[...].astype(compute_dtype),
                w1_ref[...].astype(compute_dtype),
                preferred_element_type=jnp.float32) + b1_ref[...]

    row = lax.broadcasted_iota(jnp.int32, h.shape, 0) + i * tile_b
    valid = row < valid_b                                # mask padded rows
    tile_max = jnp.max(jnp.where(valid, h, -jnp.inf), axis=0, keepdims=True)
    tile_min = jnp.min(jnp.where(valid, h, jnp.inf), axis=0, keepdims=True)

    @pl.when(i == 0)
    def _():
        max_ref[...] = tile_max
        min_ref[...] = tile_min

    @pl.when(i > 0)
    def _():
        max_ref[...] = jnp.maximum(max_ref[...], tile_max)
        min_ref[...] = jnp.minimum(min_ref[...], tile_min)


# ----------------------------------------------------------------------------
# Tiled path, pass 2: recompute fc1 per tile, spread + fused fc3, store tile.
# ----------------------------------------------------------------------------
def _spread_fc3_pass_kernel(x_ref, w1_ref, b1_ref, min_ref, max_ref, w3_ref,
                            b3_ref, o_ref, *, spread_factor, approx_reciprocal,
                            compute_dtype):
    h = jnp.dot(x_ref[...].astype(compute_dtype),
                w1_ref[...].astype(compute_dtype),
                preferred_element_type=jnp.float32) + b1_ref[...]
    o_ref[...] = _spread_fc3_compute(
        h, min_ref[...], max_ref[...], w3_ref[...], b3_ref[...],
        spread_factor=spread_factor, approx_reciprocal=approx_reciprocal,
        compute_dtype=compute_dtype)


# ----------------------------------------------------------------------------
# Factory: pads/regroups weights ONCE, returns a jitted forward(x).
# ----------------------------------------------------------------------------
def make_spreadv2(w1_t, b1, w3_t, b3, *, spread_factor, tile_b=512,
                  compute_dtype=jnp.float32, approx_reciprocal=False):
    """w1_t: [D_in, H]; b1: [1, H] or [H]; w3_t: [H*sf, out] with rows ordered
    k = s*H + n (centroid-major); b3: [1, out] or [out]."""
    d_in, H = w1_t.shape
    out_dim = w3_t.shape[1]
    assert w3_t.shape[0] == H * spread_factor

    H_pad = _round_up(H, 128)
    out_pad = _round_up(out_dim, 128)
    sublane = 16 if compute_dtype == jnp.bfloat16 else 8   # bf16 packs 16 rows
    assert tile_b % sublane == 0

    # --- one-time weight padding / regrouping (hoisted out of the forward) ---
    # Zero-padded hidden columns of w1/b1 give h == 0 there; x_prime == 0 hits
    # the first centroid with value 1.0, which is cancelled ONLY because the
    # corresponding rows of w3_p are exactly zero.  Keep that padding zero.
    w1_p = jnp.pad(w1_t, ((0, 0), (0, H_pad - H)))
    b1_p = jnp.pad(jnp.reshape(b1, (1, H)), ((0, 0), (0, H_pad - H)))
    w3_p = jnp.reshape(
        jnp.pad(jnp.reshape(w3_t, (spread_factor, H, out_dim)),
                ((0, 0), (0, H_pad - H), (0, out_pad - out_dim))),
        (spread_factor * H_pad, out_pad))
    b3_p = jnp.pad(jnp.reshape(b3, (1, out_dim)), ((0, 0), (0, out_pad - out_dim)))

    def _forward_single(x):
        B = x.shape[0]
        B_pad = _round_up(max(B, sublane), sublane)
        x_p = jnp.pad(x, ((0, B_pad - B), (0, 0))) if B_pad != B else x
        kernel = functools.partial(
            _spreadv2_fused_kernel, spread_factor=spread_factor, valid_b=B,
            approx_reciprocal=approx_reciprocal, compute_dtype=compute_dtype)
        out_p = pl.pallas_call(
            kernel,
            out_shape=jax.ShapeDtypeStruct((B_pad, out_pad), jnp.float32),
            in_specs=[pl.BlockSpec(memory_space=pltpu.MemorySpace.VMEM)] * 5,
            out_specs=pl.BlockSpec(memory_space=pltpu.MemorySpace.VMEM),
        )(x_p, w1_p, b1_p, w3_p, b3_p)
        return out_p[:B, :out_dim]

    def _forward_tiled(x):
        B = x.shape[0]
        B_pad = _round_up(B, tile_b)
        x_p = jnp.pad(x, ((0, B_pad - B), (0, 0))) if B_pad != B else x
        nt = B_pad // tile_b

        # Pass 1: batch-global per-neuron min/max (reduction axis -> arbitrary).
        mm_kernel = functools.partial(
            _minmax_pass_kernel, valid_b=B, tile_b=tile_b,
            compute_dtype=compute_dtype)
        x_min, x_max = pl.pallas_call(
            mm_kernel,
            out_shape=(jax.ShapeDtypeStruct((1, H_pad), jnp.float32),
                       jax.ShapeDtypeStruct((1, H_pad), jnp.float32)),
            grid_spec=pltpu.PrefetchScalarGridSpec(
                num_scalar_prefetch=0, grid=(nt,),
                in_specs=[pl.BlockSpec((tile_b, d_in), lambda i: (i, 0)),
                          pl.BlockSpec((d_in, H_pad), lambda i: (0, 0)),
                          pl.BlockSpec((1, H_pad), lambda i: (0, 0))],
                out_specs=(pl.BlockSpec((1, H_pad), lambda i: (0, 0)),
                           pl.BlockSpec((1, H_pad), lambda i: (0, 0)))),
            compiler_params=pltpu.CompilerParams(
                dimension_semantics=("arbitrary",)),
        )(x_p, w1_p, b1_p)

        # Pass 2: per-tile fc1 recompute + spread + fused fc3 (parallel axis;
        # weights have constant index_maps so they stay VMEM-resident).
        sp_kernel = functools.partial(
            _spread_fc3_pass_kernel, spread_factor=spread_factor,
            approx_reciprocal=approx_reciprocal, compute_dtype=compute_dtype)
        out_p = pl.pallas_call(
            sp_kernel,
            out_shape=jax.ShapeDtypeStruct((B_pad, out_pad), jnp.float32),
            grid_spec=pltpu.PrefetchScalarGridSpec(
                num_scalar_prefetch=0, grid=(nt,),
                in_specs=[pl.BlockSpec((tile_b, d_in), lambda i: (i, 0)),
                          pl.BlockSpec((d_in, H_pad), lambda i: (0, 0)),
                          pl.BlockSpec((1, H_pad), lambda i: (0, 0)),
                          pl.BlockSpec((1, H_pad), lambda i: (0, 0)),
                          pl.BlockSpec((1, H_pad), lambda i: (0, 0)),
                          pl.BlockSpec((spread_factor * H_pad, out_pad),
                                       lambda i: (0, 0)),
                          pl.BlockSpec((1, out_pad), lambda i: (0, 0))],
                out_specs=pl.BlockSpec((tile_b, out_pad), lambda i: (i, 0))),
            compiler_params=pltpu.CompilerParams(
                dimension_semantics=("parallel",)),
        )(x_p, w1_p, b1_p, x_min, x_max, w3_p, b3_p)
        return out_p[:B, :out_dim]

    @jax.jit
    def forward(x):
        assert x.ndim == 2 and x.shape[1] == d_in
        if x.shape[0] <= tile_b:          # static under jit
            return _forward_single(x)
        return _forward_tiled(x)

    return forward


# ----------------------------------------------------------------------------
# Pure-JAX reference mirroring the PyTorch forward (training=True).
# ----------------------------------------------------------------------------
def spreadv2_reference(x, w1_t, b1, w3_t, b3, *, spread_factor):
    h = x @ w1_t + jnp.reshape(b1, (1, -1))
    x_max = jnp.max(h, axis=0, keepdims=True)
    x_min = jnp.min(h, axis=0, keepdims=True)
    denom = x_max - x_min
    denom = jnp.where(denom == 0.0, 1.0, denom)
    xp = (h - x_min) / denom * spread_factor
    cols = []
    for s in range(spread_factor):
        c = s + 0.5
        nc = jnp.maximum(0.0, 1.0 - jnp.abs(c - xp))
        cond = jnp.zeros(xp.shape, dtype=bool)
        if s == 0:
            cond = cond | (xp < c)
        if s == spread_factor - 1:
            cond = cond | (xp > c)
        cols.append(jnp.where(cond, 1.0, nc))
    spread = jnp.concatenate(cols, axis=1)                # column k = s*H + n
    return spread @ w3_t + jnp.reshape(b3, (1, -1))


if __name__ == "__main__":
    B, D_IN, SF, OUT = 4, 32, 4, 10
    H = N_HIDDEN

    key = jax.random.PRNGKey(0)
    k_x, k_w1, k_b1, k_w3, k_b3, k_x2 = jax.random.split(key, 6)

    x = jax.random.normal(k_x, (B, D_IN), dtype=jnp.float32)

    # Deterministic Xavier-uniform-style init (fc1: [H, D_IN], fc3: [OUT, H*SF]),
    # stored pre-transposed for the kernel.
    bound1 = (6.0 / (D_IN + H)) ** 0.5
    w1_t = jax.random.uniform(k_w1, (D_IN, H), jnp.float32, -bound1, bound1)
    b1 = jax.random.uniform(k_b1, (1, H), jnp.float32, -0.1, 0.1)

    bound3 = (6.0 / (H * SF + OUT)) ** 0.5
    w3_t = jax.random.uniform(k_w3, (H * SF, OUT), jnp.float32, -bound3, bound3)
    b3 = jax.random.uniform(k_b3, (1, OUT), jnp.float32, -0.1, 0.1)

    # Weight padding/regrouping happens once here (hoisted out of forward).
    # tile_b=16 only to exercise the tiled two-pass path at small test shapes;
    # production default is 512.
    fwd = make_spreadv2(w1_t, b1, w3_t, b3, spread_factor=SF, tile_b=16)

    # Path 1: small batch -> single fused kernel (one pallas_call).
    out = jax.block_until_ready(fwd(x))
    ref = spreadv2_reference(x, w1_t, b1, w3_t, b3, spread_factor=SF)
    assert out.shape == (B, OUT)
    assert jnp.allclose(out, ref, rtol=1e-4, atol=1e-4), "single-block mismatch"

    # Path 2: batch > tile_b -> two-pass B-tiled grid (global batch min/max).
    B2 = 40
    x2 = jax.random.normal(k_x2, (B2, D_IN), dtype=jnp.float32)
    out2 = jax.block_until_ready(fwd(x2))
    ref2 = spreadv2_reference(x2, w1_t, b1, w3_t, b3, spread_factor=SF)
    assert out2.shape == (B2, OUT)
    assert jnp.allclose(out2, ref2, rtol=1e-4, atol=1e-4), "tiled path mismatch"

    print("KERNEL_OK")
</pallas_src>

<mosaic_0001>
module attributes {stable_mosaic.version = 11 : i64} {
  func.func @_spreadv2_fused_kernel(%arg0: memref<8x32xf32, #tpu.memory_space<vmem>>, %arg1: memref<32x128xf32, #tpu.memory_space<vmem>>, %arg2: memref<1x128xf32, #tpu.memory_space<vmem>>, %arg3: memref<512x128xf32, #tpu.memory_space<vmem>>, %arg4: memref<1x128xf32, #tpu.memory_space<vmem>>, %arg5: memref<8x128xf32, #tpu.memory_space<vmem>>) attributes {dimension_semantics = [], scalar_prefetch = 0 : i64, scratch_operands = 0 : i64, tpu.core_type = #tpu.core_type<tc>} {
    %c0 = arith.constant 0 : index
    %c0_0 = arith.constant 0 : index
    %0 = vector.load %arg0[%c0, %c0_0] : memref<8x32xf32, #tpu.memory_space<vmem>>, vector<8x32xf32>
    %c0_1 = arith.constant 0 : index
    %c0_2 = arith.constant 0 : index
    %1 = vector.load %arg1[%c0_1, %c0_2] : memref<32x128xf32, #tpu.memory_space<vmem>>, vector<32x128xf32>
    %cst = arith.constant dense<0.000000e+00> : vector<8x128xf32>
    %2 = tpu.matmul %0, %1, %cst {dimension_numbers = #tpu.dot_dimension_numbers<[1], [0], [0], [1], [0, 0, 1, 1], [], []>} : vector<8x32xf32>, vector<32x128xf32>, vector<8x128xf32> -> vector<8x128xf32>
    %c0_3 = arith.constant 0 : index
    %c0_4 = arith.constant 0 : index
    %3 = vector.load %arg2[%c0_3, %c0_4] : memref<1x128xf32, #tpu.memory_space<vmem>>, vector<1x128xf32>
    %4 = vector.broadcast %3 : vector<1x128xf32> to vector<8x128xf32>
    %5 = arith.addf %2, %4 : vector<8x128xf32>
    %6 = tpu.iota {dimensions = array<i32: 0>} : vector<8x128xi32>
    %c4_i32 = arith.constant 4 : i32
    %7 = vector.broadcast %c4_i32 : i32 to vector<8x128xi32>
    %8 = arith.cmpi slt, %6, %7 : vector<8x128xi32>
    %cst_5 = arith.constant 0xFF800000 : f32
    %9 = vector.broadcast %cst_5 : f32 to vector<8x128xf32>
    %10 = arith.select %8, %5, %9 : vector<8x128xi1>, vector<8x128xf32>
    %cst_6 = arith.constant dense<0xFF800000> : vector<128xf32>
    %11 = vector.multi_reduction <maximumf>, %10, %cst_6 [0] : vector<8x128xf32> to vector<128xf32>
    %12 = vector.shape_cast %11 : vector<128xf32> to vector<1x128xf32>
    %cst_7 = arith.constant 0x7F800000 : f32
    %13 = vector.broadcast %cst_7 : f32 to vector<8x128xf32>
    %14 = arith.select %8, %5, %13 : vector<8x128xi1>, vector<8x128xf32>
    %cst_8 = arith.constant dense<0x7F800000> : vector<128xf32>
    %15 = vector.multi_reduction <minimumf>, %14, %cst_8 [0] : vector<8x128xf32> to vector<128xf32>
    %16 = vector.shape_cast %15 : vector<128xf32> to vector<1x128xf32>
    %c0_9 = arith.constant 0 : index
    %c0_10 = arith.constant 0 : index
    %17 = vector.load %arg3[%c0_9, %c0_10] : memref<512x128xf32, #tpu.memory_space<vmem>>, vector<512x128xf32>
    %c0_11 = arith.constant 0 : index
    %c0_12 = arith.constant 0 : index
    %18 = vector.load %arg4[%c0_11, %c0_12] : memref<1x128xf32, #tpu.memory_space<vmem>>, vector<1x128xf32>
    %19 = arith.subf %12, %16 : vector<1x128xf32>
    %cst_13 = arith.constant 0.000000e+00 : f32
    %20 = vector.broadcast %cst_13 : f32 to vector<1x128xf32>
    %21 = arith.cmpf oeq, %19, %20 : vector<1x128xf32>
    %cst_14 = arith.constant 1.000000e+00 : f32
    %22 = vector.broadcast %cst_14 : f32 to vector<1x128xf32>
    %23 = arith.select %21, %22, %19 : vector<1x128xi1>, vector<1x128xf32>
    %24 = tpu.reciprocal %23 : vector<1x128xf32> -> vector<1x128xf32>
    %cst_15 = arith.constant 4.000000e+00 : f32
    %25 = vector.broadcast %cst_15 : f32 to vector<1x128xf32>
    %26 = arith.mulf %24, %25 : vector<1x128xf32>
    %27 = vector.broadcast %16 : vector<1x128xf32> to vector<8x128xf32>
    %28 = arith.subf %5, %27 : vector<8x128xf32>
    %29 = vector.broadcast %26 : vector<1x128xf32> to vector<8x128xf32>
    %30 = arith.mulf %28, %29 : vector<8x128xf32>
    %cst_16 = arith.constant 5.000000e-01 : f32
    %31 = vector.broadcast %cst_16 : f32 to vector<8x128xf32>
    %32 = arith.subf %31, %30 : vector<8x128xf32>
    %33 = math.absf %32 : vector<8x128xf32>
    %cst_17 = arith.constant 1.000000e+00 : f32
    %34 = vector.broadcast %cst_17 : f32 to vector<8x128xf32>
    %35 = arith.subf %34, %33 : vector<8x128xf32>
    %cst_18 = arith.constant 0.000000e+00 : f32
    %36 = vector.broadcast %cst_18 : f32 to vector<8x128xf32>
    %37 = arith.maximumf %36, %35 : vector<8x128xf32>
    %cst_19 = arith.constant 5.000000e-01 : f32
    %38 = vector.broadcast %cst_19 : f32 to vector<8x128xf32>
    %39 = arith.cmpf olt, %30, %38 : vector<8x128xf32>
    %cst_20 = arith.constant 1.000000e+00 : f32
    %40 = vector.broadcast %cst_20 : f32 to vector<8x128xf32>
    %41 = arith.select %39, %40, %37 : vector<8x128xi1>, vector<8x128xf32>
    %cst_21 = arith.constant 1.500000e+00 : f32
    %42 = vector.broadcast %cst_21 : f32 to vector<8x128xf32>
    %43 = arith.subf %42, %30 : vector<8x128xf32>
    %44 = math.absf %43 : vector<8x128xf32>
    %cst_22 = arith.constant 1.000000e+00 : f32
    %45 = vector.broadcast %cst_22 : f32 to vector<8x128xf32>
    %46 = arith.subf %45, %44 : vector<8x128xf32>
    %cst_23 = arith.constant 0.000000e+00 : f32
    %47 = vector.broadcast %cst_23 : f32 to vector<8x128xf32>
    %48 = arith.maximumf %47, %46 : vector<8x128xf32>
    %cst_24 = arith.constant 2.500000e+00 : f32
    %49 = vector.broadcast %cst_24 : f32 to vector<8x128xf32>
    %50 = arith.subf %49, %30 : vector<8x128xf32>
    %51 = math.absf %50 : vector<8x128xf32>
    %cst_25 = arith.constant 1.000000e+00 : f32
    %52 = vector.broadcast %cst_25 : f32 to vector<8x128xf32>
    %53 = arith.subf %52, %51 : vector<8x128xf32>
    %cst_26 = arith.constant 0.000000e+00 : f32
    %54 = vector.broadcast %cst_26 : f32 to vector<8x128xf32>
    %55 = arith.maximumf %54, %53 : vector<8x128xf32>
    %cst_27 = arith.constant 3.500000e+00 : f32
    %56 = vector.broadcast %cst_27 : f32 to vector<8x128xf32>
    %57 = arith.subf %56, %30 : vector<8x128xf32>
    %58 = math.absf %57 : vector<8x128xf32>
    %cst_28 = arith.constant 1.000000e+00 : f32
    %59 = vector.broadcast %cst_28 : f32 to vector<8x128xf32>
    %60 = arith.subf %59, %58 : vector<8x128xf32>
    %cst_29 = arith.constant 0.000000e+00 : f32
    %61 = vector.broadcast %cst_29 : f32 to vector<8x128xf32>
    %62 = arith.maximumf %61, %60 : vector<8x128xf32>
    %cst_30 = arith.constant 3.500000e+00 : f32
    %63 = vector.broadcast %cst_30 : f32 to vector<8x128xf32>
    %64 = arith.cmpf ogt, %30, %63 : vector<8x128xf32>
    %cst_31 = arith.constant 1.000000e+00 : f32
    %65 = vector.broadcast %cst_31 : f32 to vector<8x128xf32>
    %66 = arith.select %64, %65, %62 : vector<8x128xi1>, vector<8x128xf32>
    %67 = tpu.concatenate %41, %48, %55, %66 in 1 : vector<8x128xf32>, vector<8x128xf32>, vector<8x128xf32>, vector<8x128xf32> -> vector<8x512xf32>
    %cst_32 = arith.constant dense<0.000000e+00> : vector<8x128xf32>
    %68 = tpu.matmul %67, %17, %cst_32 {dimension_numbers = #tpu.dot_dimension_numbers<[1], [0], [0], [1], [0, 0, 1, 1], [], []>} : vector<8x512xf32>, vector<512x128xf32>, vector<8x128xf32> -> vector<8x128xf32>
    %69 = vector.broadcast %18 : vector<1x128xf32> to vector<8x128xf32>
    %70 = arith.addf %68, %69 : vector<8x128xf32>
    %c0_33 = arith.constant 0 : index
    %c0_34 = arith.constant 0 : index
    %71 = vector.load %arg5[%c0_33, %c0_34] : memref<8x128xf32, #tpu.memory_space<vmem>>, vector<8x128xf32>
    tpu.vector_store %arg5[%c0_33, %c0_34], %70 {strides = array<i32>} : memref<8x128xf32, #tpu.memory_space<vmem>>, vector<8x128xf32>,
    return
  }
}

</mosaic_0001>

<llo_original>
// kernel: forward.1
$region0: #{forward.1}
  #allocation0 [shape = 'u32[]', space=smem, size = 0x4, offset = 0x4, fixed_abs, tag = 'smem constant byte address 0x4 - core index']
  #allocation1 [shape = 'u32[144,128]{1,0:T(1,128)}', space=vmem, size = 0x12000, scoped, tag = 'internal scratch']
  %s0 = inlined_call_operand.vmem [shape: f32[8,32], index: 0, kind: input, shape index: {}]
  %s1 = inlined_call_operand.hbm [shape: f32[32,128], index: 1, kind: input, shape index: {}]
  %s2 = inlined_call_operand.vmem [shape: f32[1,128], index: 2, kind: input, shape index: {}]
  %s3 = inlined_call_operand.hbm [shape: f32[512,128], index: 3, kind: input, shape index: {}]
  %s4 = inlined_call_operand.vmem [shape: f32[1,128], index: 4, kind: input, shape index: {}]
  %s5 = inlined_call_operand.vmem [shape: f32[8,128], index: 5, kind: output, shape index: {}]
  %s6 = sld [smem:[#allocation0]]
  $region38: #{forward.1} parent=0
    _
  %s8 = ssub.s32 1, %s6
  %s9 = scalar_select 0, %s8, %s6
  $region1: #{forward.1} parent=0
    #allocation2 [shape = 'u8[16384]{0}', space=vmem, size = 0x4000, scoped, tag = 'input window, operand 1, single buffered']
    #allocation3 [shape = 's32[1]{0}', space=sflag, size = 0x4, scoped, tag = 'scoped memory for forward.1']
    #allocation4 [shape = 'u8[262144]{0}', space=vmem, size = 0x40000, scoped, tag = 'input window, operand 3, single buffered']
    #allocation5 [shape = 's32[1]{0}', space=sflag, size = 0x4, scoped, tag = 'scoped memory for forward.1']
    %10 = vsyncpa [#allocation3], 0
    %11 = vsyncpa [#allocation5], 0
    // Predicated region
    $region2: #{forward.1} parent=1 // pred_check
      _
    $region3: #{forward.1} parent=1 // pred_check_branch
      %13 = sbr.rel (0) target = $region5
    $region4: #{forward.1} parent=1 // pred_region
      _
    $region5: #{forward.1} parent=1 // pred_fallthru
      _
    // Predicated region
    $region6: #{forward.1} parent=1 // pred_check
      _
    $region7: #{forward.1} parent=1 // pred_check_branch
      %15 = sbr.rel (0) target = $region9
    $region8: #{forward.1} parent=1 // pred_region
      %s17 = ssub.s32 512, 512
      %18 = vsyncadd [#allocation3], %s17
      %s19 = sshll.u32 [#allocation2], 4
      %s20 = int_to_ptr.vmem [resolvable:$true] %s19
      %25 = dma.hbm_to_vmem [thread:$0]  %s1, 512, %s20, [#allocation3], 128, 128, 8
    $region9: #{forward.1} parent=1 // pred_fallthru
      _
    // Predicated region
    $region10: #{forward.1} parent=1 // pred_check
      _
    $region11: #{forward.1} parent=1 // pred_check_branch
      %27 = sbr.rel (0) target = $region13
    $region12: #{forward.1} parent=1 // pred_region
      _
    $region13: #{forward.1} parent=1 // pred_fallthru
      _
    // Predicated region
    $region14: #{forward.1} parent=1 // pred_check
      _
    $region15: #{forward.1} parent=1 // pred_check_branch
      %29 = sbr.rel (0) target = $region17
    $region16: #{forward.1} parent=1 // pred_region
      %s31 = ssub.s32 8192, 8192
      %32 = vsyncadd [#allocation5], %s31
      %s33 = sshll.u32 [#allocation4], 4
      %s34 = int_to_ptr.vmem [resolvable:$true] %s33
      %39 = dma.hbm_to_vmem [thread:$0]  %s3, 8192, %s34, [#allocation5], 128, 128, 8
    $region17: #{forward.1} parent=1 // pred_fallthru
      _
    // Predicated region
    $region18: #{forward.1} parent=1 // pred_check
      _
    $region19: #{forward.1} parent=1 // pred_check_branch
      %41 = sbr.rel (0) target = $region21
    $region20: #{forward.1} parent=1 // pred_region
      _
    $region21: #{forward.1} parent=1 // pred_fallthru
      _
    // Predicated region
    $region22: #{forward.1} parent=1 // pred_check
      _
    $region23: #{forward.1} parent=1 // pred_check_branch
      %43 = sbr.rel (0) target = $region25
    $region24: #{forward.1} parent=1 // pred_region
      %44 = dma.done [#allocation3], 512
    $region25: #{forward.1} parent=1 // pred_fallthru
      _
    // Predicated region
    $region26: #{forward.1} parent=1 // pred_check
      _
    $region27: #{forward.1} parent=1 // pred_check_branch
      %46 = sbr.rel (0) target = $region29
    $region28: #{forward.1} parent=1 // pred_region
      %47 = dma.done [#allocation5], 8192
    $region29: #{forward.1} parent=1 // pred_fallthru
      _
    %v48 = vld [vmem:[%s0] sm:$0xff]
    %v49 = vld [vmem:[#allocation2] sm:$0xff]
    %v50 = vld [vmem:[#allocation2 + $0x8] sm:$0xff]
    %v51 = vld [vmem:[#allocation2 + $0x10] sm:$0xff]
    %v52 = vld [vmem:[#allocation2 + $0x18] sm:$0xff]
    %v53 = vld [vmem:[%s2] sm:$0x1]
    %v55 = vlaneseq
    %v56 = vshrl.u32 %v55, 7
    %v57 = vsub.s32 0, %v56
    %v58 = vrot.slane %v53, %v57
    %vm60 = vcmask 261120
    %v62 = vsel %vm60, %v48, 0
    %64 = vmatprep.subr.mxu0 0.0
    %65 = vmatpush1.msra.mxu0 %v49
    %66 = vmatprep.subr.mxu0 0.0
    %67 = vmatpush1.msra.mxu0 %v50
    %68 = vmatprep.subr.mxu0 0.0
    %69 = vmatpush1.msra.mxu0 %v51
    %70 = vmatprep.subr.mxu0 0.0
    %71 = vmatpush1.msra.mxu0 %v52
    %72 = vmatprep.subr.mxu0 0.0
    %73 = vmatpush1.msra.mxu0 0.0
    %74 = vmatprep.subr.mxu0 0.0
    %75 = vmatpush1.msra.mxu0 0.0
    %76 = vmatprep.subr.mxu0 0.0
    %77 = vmatpush1.msra.mxu0 0.0
    %78 = vmatprep.subr.mxu0 0.0
    %79 = vmatpush1.msra.mxu0 0.0
    %80 = vmatprep.subr.mxu0 0.0
    %81 = vmatpush1.msra.mxu0 0.0
    %82 = vmatprep.subr.mxu0 0.0
    %83 = vmatpush1.msra.mxu0 0.0
    %84 = vmatprep.subr.mxu0 0.0
    %85 = vmatpush1.msra.mxu0 0.0
    %86 = vmatprep.subr.mxu0 0.0
    %87 = vmatpush1.msra.mxu0 0.0
    %88 = vmatprep.subr.mxu0 0.0
    %89 = vmatpush1.msra.mxu0 0.0
    %90 = vmatprep.subr.mxu0 0.0
    %91 = vmatpush1.msra.mxu0 0.0
    %92 = vmatprep.subr.mxu0 0.0
    %93 = vmatpush1.msra.mxu0 0.0
    %94 = vmatprep.subr.mxu0 0.0
    %95 = vmatpush1.msra.mxu0 0.0
    %96 = vmatprep.subr.mxu0 0.0
    %97 = vmatpush1.msra.mxu0 0.0
    %98 = vmatprep.subr.mxu0 0.0
    %99 = vmatpush1.msra.mxu0 0.0
    %100 = vmatprep.subr.mxu0 0.0
    %101 = vmatpush1.msra.mxu0 0.0
    %102 = vmatprep.subr.mxu0 0.0
    %103 = vmatpush1.msra.mxu0 0.0
    %104 = vmatprep.subr.mxu0 0.0
    %105 = vmatpush1.msra.mxu0 0.0
    %106 = vmatprep.subr.mxu0 0.0
    %107 = vmatpush1.msra.mxu0 0.0
    %108 = vmatprep.subr.mxu0 0.0
    %109 = vmatpush1.msra.mxu0 0.0
    %110 = vmatprep.subr.mxu0 0.0
    %111 = vmatpush1.msra.mxu0 0.0
    %112 = vmatprep.subr.mxu0 0.0
    %113 = vmatpush1.msra.mxu0 0.0
    %114 = vmatprep.subr.mxu0 0.0
    %115 = vmatpush1.msra.mxu0 0.0
    %116 = vmatprep.subr.mxu0 0.0
    %117 = vmatpush1.msra.mxu0 0.0
    %118 = vmatprep.subr.mxu0 0.0
    %119 = vmatpush1.msra.mxu0 0.0
    %120 = vmatprep.subr.mxu0 0.0
    %121 = vmatpush1.msra.mxu0 0.0
    %122 = vmatprep.subr.mxu0 0.0
    %123 = vmatpush1.msra.mxu0 0.0
    %124 = vmatprep.subr.mxu0 0.0
    %125 = vmatpush1.msra.mxu0 0.0
    %126 = vmatprep.subr.mxu0 0.0
    %127 = vmatpush1.msra.mxu0 0.0
    %128 = vmatprep.mubr.f32.mxu0 0.0
    %129 = vmatmul.mubr.f32.gmra.mrb[0].mxu0 %v62
    %v130 = vpop.f32.mrb[0].mxu0
    %v131 = vadd.f32 %v58, %v130
    %v132 = vpop.f32.mrb[0].mxu0
    %133 = vdwg.mxu0
    %v134 = vlaneseq
    %v135 = vshrl.u32 %v134, 7
    %vm136 = vcmp.lt.s32.totalorder %v135, 4
    %v137 = vsel %vm136, %v131, -inf
    %v138 = vrot.slane %v137, 4
    %v139 = vmax.f32 %v137, %v138
    %v140 = vrot.slane %v139, 2
    %v141 = vmax.f32 %v139, %v140
    %v142 = vrot.slane %v141, 1
    %v143 = vmax.f32 %v141, %v142
    %v144 = vsel %vm136, %v131, inf
    %v145 = vrot.slane %v144, 4
    %v146 = vmin.f32 %v144, %v145
    %v147 = vrot.slane %v146, 2
    %v148 = vmin.f32 %v146, %v147
    %v149 = vrot.slane %v148, 1
    %v150 = vmin.f32 %v148, %v149
    %v151 = vld [vmem:[#allocation4] sm:$0xff]
    %v152 = vld [vmem:[#allocation4 + $0x8] sm:$0xff]
    %v153 = vld [vmem:[#allocation4 + $0x10] sm:$0xff]
    %v154 = vld [vmem:[#allocation4 + $0x18] sm:$0xff]
    %v155 = vld [vmem:[#allocation4 + $0x20] sm:$0xff]
    %v156 = vld [vmem:[#allocation4 + $0x28] sm:$0xff]
    %v157 = vld [vmem:[#allocation4 + $0x30] sm:$0xff]
    %v158 = vld [vmem:[#allocation4 + $0x38] sm:$0xff]
    %v159 = vld [vmem:[#allocation4 + $0x40] sm:$0xff]
    %v160 = vld [vmem:[#allocation4 + $0x48] sm:$0xff]
    %v161 = vld [vmem:[#allocation4 + $0x50] sm:$0xff]
    %v162 = vld [vmem:[#allocation4 + $0x58] sm:$0xff]
    %v163 = vld [vmem:[#allocation4 + $0x60] sm:$0xff]
    %v164 = vld [vmem:[#allocation4 + $0x68] sm:$0xff]
    %v165 = vld [vmem:[#allocation4 + $0x70] sm:$0xff]
    %v166 = vld [vmem:[#allocation4 + $0x78] sm:$0xff]
    %v167 = vld [vmem:[#allocation4 + $0x80] sm:$0xff]
    %v168 = vld [vmem:[#allocation4 + $0x88] sm:$0xff]
    %v169 = vld [vmem:[#allocation4 + $0x90] sm:$0xff]
    %v170 = vld [vmem:[#allocation4 + $0x98] sm:$0xff]
    %v171 = vld [vmem:[#allocation4 + $0xa0] sm:$0xff]
    %v172 = vld [vmem:[#allocation4 + $0xa8] sm:$0xff]
    %v173 = vld [vmem:[#allocation4 + $0xb0] sm:$0xff]
    %v174 = vld [vmem:[#allocation4 + $0xb8] sm:$0xff]
    %v175 = vld [vmem:[#allocation4 + $0xc0] sm:$0xff]
    %v176 = vld [vmem:[#allocation4 + $0xc8] sm:$0xff]
    %v177 = vld [vmem:[#allocation4 + $0xd0] sm:$0xff]
    %v178 = vld [vmem:[#allocation4 + $0xd8] sm:$0xff]
    %v179 = vld [vmem:[#allocation4 + $0xe0] sm:$0xff]
    %v180 = vld [vmem:[#allocation4 + $0xe8] sm:$0xff]
    %v181 = vld [vmem:[#allocation4 + $0xf0] sm:$0xff]
    %v182 = vld [vmem:[#allocation4 + $0xf8] sm:$0xff]
    %v183 = vld [vmem:[#allocation4 + $0x100] sm:$0xff]
    %v184 = vld [vmem:[#allocation4 + $0x108] sm:$0xff]
    %v185 = vld [vmem:[#allocation4 + $0x110] sm:$0xff]
    %v186 = vld [vmem:[#allocation4 + $0x118] sm:$0xff]
    %v187 = vld [vmem:[#allocation4 + $0x120] sm:$0xff]
    %v188 = vld [vmem:[#allocation4 + $0x128] sm:$0xff]
    %v189 = vld [vmem:[#allocation4 + $0x130] sm:$0xff]
    %v190 = vld [vmem:[#allocation4 + $0x138] sm:$0xff]
    %v191 = vld [vmem:[#allocation4 + $0x140] sm:$0xff]
    %v192 = vld [vmem:[#allocation4 + $0x148] sm:$0xff]
    %v193 = vld [vmem:[#allocation4 + $0x150] sm:$0xff]
    %v194 = vld [vmem:[#allocation4 + $0x158] sm:$0xff]
    %v195 = vld [vmem:[#allocation4 + $0x160] sm:$0xff]
    %v196 = vld [vmem:[#allocation4 + $0x168] sm:$0xff]
    %v197 = vld [vmem:[#allocation4 + $0x170] sm:$0xff]
    %v198 = vld [vmem:[#allocation4 + $0x178] sm:$0xff]
    %v199 = vld [vmem:[#allocation4 + $0x180] sm:$0xff]
    %v200 = vld [vmem:[#allocation4 + $0x188] sm:$0xff]
    %v201 = vld [vmem:[#allocation4 + $0x190] sm:$0xff]
    %v202 = vld [vmem:[#allocation4 + $0x198] sm:$0xff]
    %v203 = vld [vmem:[#allocation4 + $0x1a0] sm:$0xff]
    %v204 = vld [vmem:[#allocation4 + $0x1a8] sm:$0xff]
    %v205 = vld [vmem:[#allocation4 + $0x1b0] sm:$0xff]
    %v206 = vld [vmem:[#allocation4 + $0x1b8] sm:$0xff]
    %v207 = vld [vmem:[#allocation4 + $0x1c0] sm:$0xff]
    %v208 = vld [vmem:[#allocation4 + $0x1c8] sm:$0xff]
    %v209 = vld [vmem:[#allocation4 + $0x1d0] sm:$0xff]
    %v210 = vld [vmem:[#allocation4 + $0x1d8] sm:$0xff]
    %v211 = vld [vmem:[#allocation4 + $0x1e0] sm:$0xff]
    %v212 = vld [vmem:[#allocation4 + $0x1e8] sm:$0xff]
    %v213 = vld [vmem:[#allocation4 + $0x1f0] sm:$0xff]
    %v214 = vld [vmem:[#allocation4 + $0x1f8] sm:$0xff]
    %v215 = vld [vmem:[%s4] sm:$0x1]
    %v216 = vsub.f32 %v143, %v150
    %vm217 = vcmp.eq.f32.partialorder %v216, 0.0
    %v218 = vsel %vm217, 1.0, %v216
    %v219 = vrcp.pop %v218
    %v220 = vmul.f32 %v219, 4.0
    %v221 = vsub.f32 %v131, %v150
    %v222 = vmul.f32 %v221, %v220
    %v223 = vsub.f32 0.5, %v222
    %v224 = vand.u32 2147483647, %v223
    %v225 = vsub.f32 1.0, %v224
    %v226 = vmax.f32 %v225, 0.0
    %vm227 = vcmp.lt.f32.partialorder %v222, 0.5
    %v228 = vsel %vm227, 1.0, %v226
    %v229 = vsub.f32 1.5, %v222
    %v230 = vand.u32 2147483647, %v229
    %v231 = vsub.f32 1.0, %v230
    %v232 = vmax.f32 %v231, 0.0
    %v233 = vsub.f32 2.5, %v222
    %v234 = vand.u32 2147483647, %v233
    %v235 = vsub.f32 1.0, %v234
    %v236 = vmax.f32 %v235, 0.0
    %v237 = vsub.f32 3.5, %v222
    %v238 = vand.u32 2147483647, %v237
    %v239 = vsub.f32 1.0, %v238
    %v240 = vmax.f32 %v239, 0.0
    %vm241 = vcmp.gt.f32.partialorder %v222, 3.5
    %v242 = vsel %vm241, 1.0, %v240
    %v244 = vlaneseq
    %v245 = vshrl.u32 %v244, 7
    %v246 = vsub.s32 0, %v245
    %v247 = vrot.slane %v215, %v246
    %249 = vmatprep.subr.mxu0 0.0
    %250 = vmatpush1.msra.mxu0 %v151
    %251 = vmatprep.subr.mxu0 0.0
    %252 = vmatpush1.msra.mxu0 %v152
    %253 = vmatprep.subr.mxu0 0.0
    %254 = vmatpush1.msra.mxu0 %v153
    %255 = vmatprep.subr.mxu0 0.0
    %256 = vmatpush1.msra.mxu0 %v154
    %257 = vmatprep.subr.mxu0 0.0
    %258 = vmatpush1.msra.mxu0 %v155
    %259 = vmatprep.subr.mxu0 0.0
    %260 = vmatpush1.msra.mxu0 %v156
    %261 = vmatprep.subr.mxu0 0.0
    %262 = vmatpush1.msra.mxu0 %v157
    %263 = vmatprep.subr.mxu0 0.0
    %264 = vmatpush1.msra.mxu0 %v158
    %265 = vmatprep.subr.mxu0 0.0
    %266 = vmatpush1.msra.mxu0 %v159
    %267 = vmatprep.subr.mxu0 0.0
    %268 = vmatpush1.msra.mxu0 %v160
    %269 = vmatprep.subr.mxu0 0.0
    %270 = vmatpush1.msra.mxu0 %v161
    %271 = vmatprep.subr.mxu0 0.0
    %272 = vmatpush1.msra.mxu0 %v162
    %273 = vmatprep.subr.mxu0 0.0
    %274 = vmatpush1.msra.mxu0 %v163
    %275 = vmatprep.subr.mxu0 0.0
    %276 = vmatpush1.msra.mxu0 %v164
    %277 = vmatprep.subr.mxu0 0.0
    %278 = vmatpush1.msra.mxu0 %v165
    %279 = vmatprep.subr.mxu0 0.0
    %280 = vmatpush1.msra.mxu0 %v166
    %281 = vmatprep.subr.mxu0 0.0
    %282 = vmatpush1.msra.mxu0 %v167
    %283 = vmatprep.subr.mxu0 0.0
    %284 = vmatpush1.msra.mxu0 %v168
    %285 = vmatprep.subr.mxu0 0.0
    %286 = vmatpush1.msra.mxu0 %v169
    %287 = vmatprep.subr.mxu0 0.0
    %288 = vmatpush1.msra.mxu0 %v170
    %289 = vmatprep.subr.mxu0 0.0
    %290 = vmatpush1.msra.mxu0 %v171
    %291 = vmatprep.subr.mxu0 0.0
    %292 = vmatpush1.msra.mxu0 %v172
    %293 = vmatprep.subr.mxu0 0.0
    %294 = vmatpush1.msra.mxu0 %v173
    %295 = vmatprep.subr.mxu0 0.0
    %296 = vmatpush1.msra.mxu0 %v174
    %297 = vmatprep.subr.mxu0 0.0
    %298 = vmatpush1.msra.mxu0 %v175
    %299 = vmatprep.subr.mxu0 0.0
    %300 = vmatpush1.msra.mxu0 %v176
    %301 = vmatprep.subr.mxu0 0.0
    %302 = vmatpush1.msra.mxu0 %v177
    %303 = vmatprep.subr.mxu0 0.0
    %304 = vmatpush1.msra.mxu0 %v178
    %305 = vmatprep.subr.mxu0 0.0
    %306 = vmatpush1.msra.mxu0 %v179
    %307 = vmatprep.subr.mxu0 0.0
    %308 = vmatpush1.msra.mxu0 %v180
    %309 = vmatprep.subr.mxu0 0.0
    %310 = vmatpush1.msra.mxu0 %v181
    %311 = vmatprep.subr.mxu0 0.0
    %312 = vmatpush1.msra.mxu0 %v182
    %313 = vmatprep.mubr.f32.mxu0 %v232
    %314 = vmatmul.mubr.f32.gmra.mrb[0].mxu0 %v228
    %v315 = vpop.f32.mrb[0].mxu0
    %v316 = vadd.f32 %v247, %v315
    %v317 = vpop.f32.mrb[0].mxu0
    %318 = vdwg.mxu0
    %319 = vmatprep.subr.mxu0 0.0
    %320 = vmatpush1.msra.mxu0 %v183
    %321 = vmatprep.subr.mxu0 0.0
    %322 = vmatpush1.msra.mxu0 %v184
    %323 = vmatprep.subr.mxu0 0.0
    %324 = vmatpush1.msra.mxu0 %v185
    %325 = vmatprep.subr.mxu0 0.0
    %326 = vmatpush1.msra.mxu0 %v186
    %327 = vmatprep.subr.mxu0 0.0
    %328 = vmatpush1.msra.mxu0 %v187
    %329 = vmatprep.subr.mxu0 0.0
    %330 = vmatpush1.msra.mxu0 %v188
    %331 = vmatprep.subr.mxu0 0.0
    %332 = vmatpush1.msra.mxu0 %v189
    %333 = vmatprep.subr.mxu0 0.0
    %334 = vmatpush1.msra.mxu0 %v190
    %335 = vmatprep.subr.mxu0 0.0
    %336 = vmatpush1.msra.mxu0 %v191
    %337 = vmatprep.subr.mxu0 0.0
    %338 = vmatpush1.msra.mxu0 %v192
    %339 = vmatprep.subr.mxu0 0.0
    %340 = vmatpush1.msra.mxu0 %v193
    %341 = vmatprep.subr.mxu0 0.0
    %342 = vmatpush1.msra.mxu0 %v194
    %343 = vmatprep.subr.mxu0 0.0
    %344 = vmatpush1.msra.mxu0 %v195
    %345 = vmatprep.subr.mxu0 0.0
    %346 = vmatpush1.msra.mxu0 %v196
    %347 = vmatprep.subr.mxu0 0.0
    %348 = vmatpush1.msra.mxu0 %v197
    %349 = vmatprep.subr.mxu0 0.0
    %350 = vmatpush1.msra.mxu0 %v198
    %351 = vmatprep.subr.mxu0 0.0
    %352 = vmatpush1.msra.mxu0 %v199
    %353 = vmatprep.subr.mxu0 0.0
    %354 = vmatpush1.msra.mxu0 %v200
    %355 = vmatprep.subr.mxu0 0.0
    %356 = vmatpush1.msra.mxu0 %v201
    %357 = vmatprep.subr.mxu0 0.0
    %358 = vmatpush1.msra.mxu0 %v202
    %359 = vmatprep.subr.mxu0 0.0
    %360 = vmatpush1.msra.mxu0 %v203
    %361 = vmatprep.subr.mxu0 0.0
    %362 = vmatpush1.msra.mxu0 %v204
    %363 = vmatprep.subr.mxu0 0.0
    %364 = vmatpush1.msra.mxu0 %v205
    %365 = vmatprep.subr.mxu0 0.0
    %366 = vmatpush1.msra.mxu0 %v206
    %367 = vmatprep.subr.mxu0 0.0
    %368 = vmatpush1.msra.mxu0 %v207
    %369 = vmatprep.subr.mxu0 0.0
    %370 = vmatpush1.msra.mxu0 %v208
    %371 = vmatprep.subr.mxu0 0.0
    %372 = vmatpush1.msra.mxu0 %v209
    %373 = vmatprep.subr.mxu0 0.0
    %374 = vmatpush1.msra.mxu0 %v210
    %375 = vmatprep.subr.mxu0 0.0
    %376 = vmatpush1.msra.mxu0 %v211
    %377 = vmatprep.subr.mxu0 0.0
    %378 = vmatpush1.msra.mxu0 %v212
    %379 = vmatprep.subr.mxu0 0.0
    %380 = vmatpush1.msra.mxu0 %v213
    %381 = vmatprep.subr.mxu0 0.0
    %382 = vmatpush1.msra.mxu0 %v214
    %383 = vmatprep.mubr.f32.mxu0 %v242
    %384 = vmatmul.mubr.f32.gmra.mrb[0].mxu0 %v236
    %v385 = vpop.f32.mrb[0].mxu0
    %v386 = vadd.f32 %v316, %v385
    %v387 = vpop.f32.mrb[0].mxu0
    %388 = vdwg.mxu0
    %389 = vst [vmem:[%s5] sm:$0xff] %v386
    // Predicated region
    $region30: #{forward.1} parent=1 // pred_check
      _
    $region31: #{forward.1} parent=1 // pred_check_branch
      %391 = sbr.rel (0) target = $region33
    $region32: #{forward.1} parent=1 // pred_region
      _
    $region33: #{forward.1} parent=1 // pred_fallthru
      _
    // Predicated region
    $region34: #{forward.1} parent=1 // pred_check
      _
    $region35: #{forward.1} parent=1 // pred_check_branch
      %393 = sbr.rel (0) target = $region37
    $region36: #{forward.1} parent=1 // pred_region
      _
    $region37: #{forward.1} parent=1 // pred_fallthru
      _
    %394 = vsyncpa [#allocation3], 1
    %395 = vsyncpa [#allocation5], 1

</llo_original>
